<compile_context>
chip_gen: v5e
topology: v5e:2x2
jax: 0.10.0
libtpu: 0.0.40
codegen_flags: <defaults>
</compile_context>

<pallas_src>
import functools

import jax
import jax.numpy as jnp
from jax.experimental import pallas as pl
from jax.experimental.pallas import tpu as pltpu


def _round_up(x, m):
    return (x + m - 1) // m * m


def _sigmoid(v):
    return 1.0 / (1.0 + jnp.exp(-v))


def _vmem_phys_bytes():
    try:
        return int(pltpu.get_tpu_info().vmem_capacity_bytes)
    except Exception:
        return 64 << 20  # conservative (v7x per-TC physical VMEM)


# ---------------------------------------------------------------------------
# Fused single-pass kernel: whole (C, P) sample resident in VMEM, x read once.
# ---------------------------------------------------------------------------
def se_fused_kernel(x_ref, w1t_ref, b1_ref, w2m_ref, b2_ref, ws8_ref, bs_ref,
                    o_ref, *, inv_p):
    x = x_ref[0].astype(jnp.float32)                                   # (C, P)

    # channel gate: global mean -> C->Cmid (+ReLU) -> Cmid->C (+sigmoid)
    mean = jnp.sum(x, axis=-1, keepdims=True) * inv_p                  # (C, 1)
    h = jnp.sum(w1t_ref[...] * mean, axis=0, keepdims=True) + b1_ref[...]   # (1, Cmid)
    h = jnp.maximum(h, 0.0)
    g = jnp.sum(w2m_ref[...] * h, axis=1, keepdims=True) + b2_ref[...]      # (C, 1)
    cg = _sigmoid(g)

    # spatial gate: 1x1 conv C->1 as an MXU matvec (ws padded to 8 sublanes, rows 1..7 zero)
    prod = jnp.dot(ws8_ref[...], x, preferred_element_type=jnp.float32)     # (8, P)
    sg = _sigmoid(prod[0:1, :] + bs_ref[0])                                 # (1, P)

    o_ref[0] = (x * (cg + sg)).astype(o_ref.dtype)                     # == x*cg + x*sg


# ---------------------------------------------------------------------------
# Streaming fallback (two passes) for samples too large to keep resident.
# ---------------------------------------------------------------------------
def se_gate_kernel(x_ref, w1t_ref, b1_ref, w2m_ref, b2_ref, gate_ref, sum_ref,
                   *, inv_p, total_p, tp):
    p_idx = pl.program_id(1)

    @pl.when(p_idx == 0)
    def _():
        sum_ref[...] = jnp.zeros_like(sum_ref)

    x = x_ref[0].astype(jnp.float32)                                   # (C, TP)
    # mask ragged pixel tail (no host-side padding of x)
    lane = jax.lax.broadcasted_iota(jnp.int32, x.shape, 1)
    x = jnp.where(p_idx * tp + lane < total_p, x, 0.0)
    sum_ref[...] += jnp.sum(x, axis=-1, keepdims=True)                 # (C, 1)

    @pl.when(p_idx == pl.num_programs(1) - 1)
    def _():
        mean = sum_ref[...] * inv_p
        h = jnp.sum(w1t_ref[...] * mean, axis=0, keepdims=True) + b1_ref[...]
        h = jnp.maximum(h, 0.0)
        g = jnp.sum(w2m_ref[...] * h, axis=1, keepdims=True) + b2_ref[...]
        gate_ref[0] = _sigmoid(g)                                      # (C, 1)


def se_apply_kernel(x_ref, gate_ref, ws8_ref, bs_ref, o_ref):
    x = x_ref[0].astype(jnp.float32)                                   # (C, TP)
    cg = gate_ref[0]                                                   # (C, 1)
    prod = jnp.dot(ws8_ref[...], x, preferred_element_type=jnp.float32)     # (8, TP)
    sg = _sigmoid(prod[0:1, :] + bs_ref[0])                            # (1, TP)
    o_ref[0] = (x * (cg + sg)).astype(o_ref.dtype)


# ---------------------------------------------------------------------------
# Wrapper
# ---------------------------------------------------------------------------
def squeeze_excite(x, w1, b1, w2, b2, ws, bs, *, tile_pixels=None,
                   force_streaming=False):
    """x: (N, C, H, W).  Parameters in PyTorch Conv2d shapes:
       w1 (Cmid, C, 1, 1), b1 (Cmid,), w2 (C, Cmid, 1, 1), b2 (C,), ws (1, C, 1, 1), bs (1,)."""
    N, C, H, W = x.shape
    Cmid = w1.shape[0]
    P = H * W

    xf = x.reshape(N, C, P)                 # free view, native dtype (bf16 stays bf16)
    itemsize = x.dtype.itemsize

    # tiny host-side parameter relayouts (C*Cmid elements — negligible traffic)
    w1t = w1.reshape(Cmid, C).T.astype(jnp.float32)                    # (C, Cmid)
    b1r = b1.reshape(1, Cmid).astype(jnp.float32)
    w2m = w2.reshape(C, Cmid).astype(jnp.float32)                      # (C, Cmid)
    b2c = b2.reshape(C, 1).astype(jnp.float32)
    ws8 = jnp.zeros((8, C), jnp.float32).at[0].set(ws.reshape(C).astype(jnp.float32))
    bs1 = bs.reshape(1).astype(jnp.float32)                            # scalar -> SMEM

    phys = _vmem_phys_bytes()                                          # 64 MiB (v7x) / 128 MiB
    vmem_limit = int(min(phys * 3 // 4, 96 << 20))                     # 48 MiB v7x, 96 MiB v5e/v6e

    # fused path footprint: double-buffered x-in + out blocks of one full sample
    resident_bytes = 4 * C * P * itemsize
    use_fused = (not force_streaming) and (resident_bytes + (2 << 20) <= vmem_limit)

    if use_fused:
        out = pl.pallas_call(
            functools.partial(se_fused_kernel, inv_p=1.0 / P),
            out_shape=jax.ShapeDtypeStruct((N, C, P), x.dtype),
            grid_spec=pltpu.PrefetchScalarGridSpec(
                num_scalar_prefetch=0,
                grid=(N,),
                in_specs=[
                    pl.BlockSpec((1, C, P), lambda n: (n, 0, 0)),
                    pl.BlockSpec((C, Cmid), lambda n: (0, 0)),
                    pl.BlockSpec((1, Cmid), lambda n: (0, 0)),
                    pl.BlockSpec((C, Cmid), lambda n: (0, 0)),
                    pl.BlockSpec((C, 1), lambda n: (0, 0)),
                    pl.BlockSpec((8, C), lambda n: (0, 0)),
                    pl.BlockSpec(memory_space=pltpu.MemorySpace.SMEM),
                ],
                out_specs=pl.BlockSpec((1, C, P), lambda n: (n, 0, 0)),
            ),
            compiler_params=pltpu.CompilerParams(
                dimension_semantics=("parallel",),
                vmem_limit_bytes=vmem_limit),
        )(xf, w1t, b1r, w2m, b2c, ws8, bs1)
        return out.reshape(N, C, H, W)

    # ---- streaming fallback: large per-sample blocks tiled over pixels ----
    P128 = _round_up(P, 128)
    if tile_pixels is None:
        tile_budget = (vmem_limit - (4 << 20)) // 4        # in+out, double-buffered
        lanes = (tile_budget // max(1, C * itemsize)) // 128 * 128
        tile_pixels = min(P128, max(128, lanes))
    TP = tile_pixels
    n_pt = pl.cdiv(P, TP)

    gate = pl.pallas_call(
        functools.partial(se_gate_kernel, inv_p=1.0 / P, total_p=P, tp=TP),
        out_shape=jax.ShapeDtypeStruct((N, C, 1), jnp.float32),
        grid_spec=pltpu.PrefetchScalarGridSpec(
            num_scalar_prefetch=0,
            grid=(N, n_pt),
            in_specs=[
                pl.BlockSpec((1, C, TP), lambda n, p: (n, 0, p)),
                pl.BlockSpec((C, Cmid), lambda n, p: (0, 0)),
                pl.BlockSpec((1, Cmid), lambda n, p: (0, 0)),
                pl.BlockSpec((C, Cmid), lambda n, p: (0, 0)),
                pl.BlockSpec((C, 1), lambda n, p: (0, 0)),
            ],
            out_specs=pl.BlockSpec((1, C, 1), lambda n, p: (n, 0, 0)),
            scratch_shapes=[pltpu.VMEM((C, 1), jnp.float32)],
        ),
        compiler_params=pltpu.CompilerParams(
            dimension_semantics=("parallel", "arbitrary"),
            vmem_limit_bytes=vmem_limit),
    )(xf, w1t, b1r, w2m, b2c)

    out = pl.pallas_call(
        se_apply_kernel,
        out_shape=jax.ShapeDtypeStruct((N, C, P), x.dtype),
        grid_spec=pltpu.PrefetchScalarGridSpec(
            num_scalar_prefetch=0,
            grid=(N, n_pt),
            in_specs=[
                pl.BlockSpec((1, C, TP), lambda n, p: (n, 0, p)),
                pl.BlockSpec((1, C, 1), lambda n, p: (n, 0, 0)),
                pl.BlockSpec((8, C), lambda n, p: (0, 0)),
                pl.BlockSpec(memory_space=pltpu.MemorySpace.SMEM),
            ],
            out_specs=pl.BlockSpec((1, C, TP), lambda n, p: (n, 0, p)),
        ),
        compiler_params=pltpu.CompilerParams(
            dimension_semantics=("parallel", "parallel"),
            vmem_limit_bytes=vmem_limit),
    )(xf, gate, ws8, bs1)
    return out.reshape(N, C, H, W)


def ref_forward(x, w1, b1, w2, b2, ws, bs):
    """Pure-JAX reference matching PyTorch SqueezeExcite.forward."""
    pooled = jnp.mean(x, axis=(2, 3))                                  # (N, C)
    h = jnp.maximum(pooled @ w1[:, :, 0, 0].T + b1, 0.0)               # (N, Cmid)
    cg = 1.0 / (1.0 + jnp.exp(-(h @ w2[:, :, 0, 0].T + b2)))           # (N, C)
    slogit = jnp.einsum('nchw,c->nhw', x, ws[0, :, 0, 0]) + bs[0]      # (N, H, W)
    sg = 1.0 / (1.0 + jnp.exp(-slogit))
    return x * cg[:, :, None, None] + x * sg[:, None, :, :]


if __name__ == "__main__":
    key = jax.random.PRNGKey(0)
    k = jax.random.split(key, 7)

    N, C, reduction = 2, 32, 16
    Cmid = C // reduction                                              # = 2

    w1 = jax.random.normal(k[1], (Cmid, C, 1, 1), jnp.float32) * 0.2
    b1 = jax.random.normal(k[2], (Cmid,), jnp.float32) * 0.1
    w2 = jax.random.normal(k[3], (C, Cmid, 1, 1), jnp.float32) * 0.2
    b2 = jax.random.normal(k[4], (C,), jnp.float32) * 0.1
    ws = jax.random.normal(k[5], (1, C, 1, 1), jnp.float32) * 0.2
    bs = jax.random.normal(k[6], (1,), jnp.float32) * 0.1

    # 1) default fused (resident per-sample block) path
    x1 = jax.random.normal(k[0], (N, C, 16, 16), jnp.float32)
    out1 = jax.block_until_ready(squeeze_excite(x1, w1, b1, w2, b2, ws, bs))
    ref1 = jax.block_until_ready(ref_forward(x1, w1, b1, w2, b2, ws, bs))
    assert out1.shape == x1.shape
    assert jnp.allclose(out1, ref1, atol=1e-4, rtol=1e-4), "fused path mismatch"

    # 2) streaming fallback, forced, with a ragged pixel tail (13*13 = 169 pixels, TP=128)
    x2 = jax.random.normal(jax.random.PRNGKey(1), (N, C, 13, 13), jnp.float32)
    out2 = jax.block_until_ready(
        squeeze_excite(x2, w1, b1, w2, b2, ws, bs, force_streaming=True, tile_pixels=128))
    ref2 = jax.block_until_ready(ref_forward(x2, w1, b1, w2, b2, ws, bs))
    assert out2.shape == x2.shape
    assert jnp.allclose(out2, ref2, atol=1e-4, rtol=1e-4), "streaming path mismatch"

    print("KERNEL_OK")
</pallas_src>

<mosaic_0001>
module attributes {stable_mosaic.version = 11 : i64} {
  func.func @se_fused_kernel(%arg0: i32, %arg1: memref<1x32x256xf32, #tpu.memory_space<vmem>>, %arg2: memref<32x2xf32, #tpu.memory_space<vmem>>, %arg3: memref<1x2xf32, #tpu.memory_space<vmem>>, %arg4: memref<32x2xf32, #tpu.memory_space<vmem>>, %arg5: memref<32x1xf32, #tpu.memory_space<vmem>>, %arg6: memref<8x32xf32, #tpu.memory_space<vmem>>, %arg7: memref<1xf32, #tpu.memory_space<smem>>, %arg8: memref<1x32x256xf32, #tpu.memory_space<vmem>>) attributes {dimension_semantics = [#tpu.dimension_semantics<parallel>], iteration_bounds = array<i64: 2>, scalar_prefetch = 0 : i64, scratch_operands = 0 : i64, tpu.core_type = #tpu.core_type<tc>, window_params = [{transform_indices = @transform_0, window_bounds = array<i64: 1, 32, 256>}, {pipeline_mode = #tpu.pipeline_mode<synchronous>, transform_indices = @transform_1, window_bounds = array<i64: 32, 2>}, {pipeline_mode = #tpu.pipeline_mode<synchronous>, transform_indices = @transform_2, window_bounds = array<i64: 1, 2>}, {pipeline_mode = #tpu.pipeline_mode<synchronous>, transform_indices = @transform_3, window_bounds = array<i64: 32, 2>}, {pipeline_mode = #tpu.pipeline_mode<synchronous>, transform_indices = @transform_4, window_bounds = array<i64: 32, 1>}, {pipeline_mode = #tpu.pipeline_mode<synchronous>, transform_indices = @transform_5, window_bounds = array<i64: 8, 32>}, {transform_indices = @transform_6, window_bounds = array<i64: 1>}, {transform_indices = @transform_7, window_bounds = array<i64: 1, 32, 256>}]} {
    %c0 = arith.constant 0 : index
    %c0_0 = arith.constant 0 : index
    %c0_1 = arith.constant 0 : index
    %0 = vector.load %arg1[%c0, %c0_0, %c0_1] : memref<1x32x256xf32, #tpu.memory_space<vmem>>, vector<1x32x256xf32>
    %1 = vector.shape_cast %0 : vector<1x32x256xf32> to vector<32x256xf32>
    %cst = arith.constant dense<0.000000e+00> : vector<32xf32>
    %2 = vector.multi_reduction <add>, %1, %cst [1] : vector<32x256xf32> to vector<32xf32>
    %3 = vector.shape_cast %2 : vector<32xf32> to vector<32x1xf32>
    %cst_2 = arith.constant 3.906250e-03 : f32
    %4 = vector.broadcast %cst_2 : f32 to vector<32x1xf32>
    %5 = arith.mulf %3, %4 : vector<32x1xf32>
    %c0_3 = arith.constant 0 : index
    %c0_4 = arith.constant 0 : index
    %6 = vector.load %arg2[%c0_3, %c0_4] : memref<32x2xf32, #tpu.memory_space<vmem>>, vector<32x2xf32>
    %7 = vector.broadcast %5 : vector<32x1xf32> to vector<32x2xf32>
    %8 = arith.mulf %6, %7 : vector<32x2xf32>
    %cst_5 = arith.constant dense<0.000000e+00> : vector<2xf32>
    %9 = vector.multi_reduction <add>, %8, %cst_5 [0] : vector<32x2xf32> to vector<2xf32>
    %10 = vector.shape_cast %9 : vector<2xf32> to vector<1x2xf32>
    %c0_6 = arith.constant 0 : index
    %c0_7 = arith.constant 0 : index
    %11 = vector.load %arg3[%c0_6, %c0_7] : memref<1x2xf32, #tpu.memory_space<vmem>>, vector<1x2xf32>
    %12 = arith.addf %10, %11 : vector<1x2xf32>
    %cst_8 = arith.constant 0.000000e+00 : f32
    %13 = vector.broadcast %cst_8 : f32 to vector<1x2xf32>
    %14 = arith.maximumf %12, %13 : vector<1x2xf32>
    %c0_9 = arith.constant 0 : index
    %c0_10 = arith.constant 0 : index
    %15 = vector.load %arg4[%c0_9, %c0_10] : memref<32x2xf32, #tpu.memory_space<vmem>>, vector<32x2xf32>
    %16 = vector.broadcast %14 : vector<1x2xf32> to vector<32x2xf32>
    %17 = arith.mulf %15, %16 : vector<32x2xf32>
    %cst_11 = arith.constant dense<0.000000e+00> : vector<32xf32>
    %18 = vector.multi_reduction <add>, %17, %cst_11 [1] : vector<32x2xf32> to vector<32xf32>
    %19 = vector.shape_cast %18 : vector<32xf32> to vector<32x1xf32>
    %c0_12 = arith.constant 0 : index
    %c0_13 = arith.constant 0 : index
    %20 = vector.load %arg5[%c0_12, %c0_13] : memref<32x1xf32, #tpu.memory_space<vmem>>, vector<32x1xf32>
    %21 = arith.addf %19, %20 : vector<32x1xf32>
    %cst_14 = arith.constant 0.000000e+00 : f32
    %22 = vector.broadcast %cst_14 : f32 to vector<32x1xf32>
    %23 = arith.subf %22, %21 : vector<32x1xf32>
    %24 = math.exp %23 : vector<32x1xf32>
    %cst_15 = arith.constant 1.000000e+00 : f32
    %25 = vector.broadcast %cst_15 : f32 to vector<32x1xf32>
    %26 = arith.addf %25, %24 : vector<32x1xf32>
    %cst_16 = arith.constant 1.000000e+00 : f32
    %27 = vector.broadcast %cst_16 : f32 to vector<32x1xf32>
    %28 = arith.divf %27, %26 : vector<32x1xf32>
    %c0_17 = arith.constant 0 : index
    %c0_18 = arith.constant 0 : index
    %29 = vector.load %arg6[%c0_17, %c0_18] : memref<8x32xf32, #tpu.memory_space<vmem>>, vector<8x32xf32>
    %cst_19 = arith.constant dense<0.000000e+00> : vector<8x256xf32>
    %30 = tpu.matmul %29, %1, %cst_19 {dimension_numbers = #tpu.dot_dimension_numbers<[1], [0], [0], [1], [0, 0, 1, 1], [], []>} : vector<8x32xf32>, vector<32x256xf32>, vector<8x256xf32> -> vector<8x256xf32>
    %31 = vector.extract_strided_slice %30 {offsets = [0, 0], sizes = [1, 256], strides = [1, 1]} : vector<8x256xf32> to vector<1x256xf32>
    %c0_20 = arith.constant 0 : index
    %32 = memref.load %arg7[%c0_20] : memref<1xf32, #tpu.memory_space<smem>>
    %33 = vector.broadcast %32 : f32 to vector<1x256xf32>
    %34 = arith.addf %31, %33 : vector<1x256xf32>
    %cst_21 = arith.constant 0.000000e+00 : f32
    %35 = vector.broadcast %cst_21 : f32 to vector<1x256xf32>
    %36 = arith.subf %35, %34 : vector<1x256xf32>
    %37 = math.exp %36 : vector<1x256xf32>
    %cst_22 = arith.constant 1.000000e+00 : f32
    %38 = vector.broadcast %cst_22 : f32 to vector<1x256xf32>
    %39 = arith.addf %38, %37 : vector<1x256xf32>
    %cst_23 = arith.constant 1.000000e+00 : f32
    %40 = vector.broadcast %cst_23 : f32 to vector<1x256xf32>
    %41 = arith.divf %40, %39 : vector<1x256xf32>
    %42 = vector.broadcast %28 : vector<32x1xf32> to vector<32x256xf32>
    %43 = vector.broadcast %41 : vector<1x256xf32> to vector<32x256xf32>
    %44 = arith.addf %42, %43 : vector<32x256xf32>
    %45 = arith.mulf %1, %44 : vector<32x256xf32>
    %c0_24 = arith.constant 0 : index
    %c0_25 = arith.constant 0 : index
    %c0_26 = arith.constant 0 : index
    %46 = vector.load %arg8[%c0_24, %c0_25, %c0_26] : memref<1x32x256xf32, #tpu.memory_space<vmem>>, vector<1x32x256xf32>
    %47 = vector.shape_cast %46 : vector<1x32x256xf32> to vector<32x256xf32>
    %48 = vector.shape_cast %45 : vector<32x256xf32> to vector<1x32x256xf32>
    tpu.vector_store %arg8[%c0_24, %c0_25, %c0_26], %48 {strides = array<i32>} : memref<1x32x256xf32, #tpu.memory_space<vmem>>, vector<1x32x256xf32>,
    return
  }
  func.func @transform_0(%arg0: i32) -> (i32, i32, i32) {
    %c0_i32 = arith.constant 0 : i32
    %c0_i32_0 = arith.constant 0 : i32
    %c0_i32_1 = arith.constant 0 : i32
    return %arg0, %c0_i32, %c0_i32_0 : i32, i32, i32
  }
  func.func @transform_1(%arg0: i32) -> (i32, i32) {
    %c0_i32 = arith.constant 0 : i32
    %c0_i32_0 = arith.constant 0 : i32
    %c0_i32_1 = arith.constant 0 : i32
    return %c0_i32, %c0_i32_0 : i32, i32
  }
  func.func @transform_2(%arg0: i32) -> (i32, i32) {
    %c0_i32 = arith.constant 0 : i32
    %c0_i32_0 = arith.constant 0 : i32
    %c0_i32_1 = arith.constant 0 : i32
    return %c0_i32, %c0_i32_0 : i32, i32
  }
  func.func @transform_3(%arg0: i32) -> (i32, i32) {
    %c0_i32 = arith.constant 0 : i32
    %c0_i32_0 = arith.constant 0 : i32
    %c0_i32_1 = arith.constant 0 : i32
    return %c0_i32, %c0_i32_0 : i32, i32
  }
  func.func @transform_4(%arg0: i32) -> (i32, i32) {
    %c0_i32 = arith.constant 0 : i32
    %c0_i32_0 = arith.constant 0 : i32
    %c0_i32_1 = arith.constant 0 : i32
    return %c0_i32, %c0_i32_0 : i32, i32
  }
  func.func @transform_5(%arg0: i32) -> (i32, i32) {
    %c0_i32 = arith.constant 0 : i32
    %c0_i32_0 = arith.constant 0 : i32
    %c0_i32_1 = arith.constant 0 : i32
    return %c0_i32, %c0_i32_0 : i32, i32
  }
  func.func @transform_6(%arg0: i32) -> i32 {
    %c0_i32 = arith.constant 0 : i32
    %c0_i32_0 = arith.constant 0 : i32
    return %c0_i32 : i32
  }
  func.func @transform_7(%arg0: i32) -> (i32, i32, i32) {
    %c0_i32 = arith.constant 0 : i32
    %c0_i32_0 = arith.constant 0 : i32
    %c0_i32_1 = arith.constant 0 : i32
    return %arg0, %c0_i32, %c0_i32_0 : i32, i32, i32
  }
}

</mosaic_0001>

<llo_original>
// kernel: tpu_custom_call.1
$region0: #{tpu_custom_call.1}
  #allocation0 [shape = 'u32[]', space=smem, size = 0x4, offset = 0x4, fixed_abs, tag = 'smem constant byte address 0x4 - core index']
  #allocation1 [shape = 'u32[72,128]{1,0:T(1,128)}', space=vmem, size = 0x9000, scoped, tag = 'internal scratch']
  #allocation2 [shape = 'f32[1]{0:T(128)S(6)}', space=smem, size = 0x200, scoped, tag = 'scoped memory for tpu_custom_call.1']
  %s0 = inlined_call_operand.hbm [shape: f32[2,32,256], index: 0, kind: input, shape index: {}]
  %s1 = inlined_call_operand.vmem [shape: f32[32,2], index: 1, kind: input, shape index: {}]
  %s2 = inlined_call_operand.vmem [shape: f32[1,2], index: 2, kind: input, shape index: {}]
  %s3 = inlined_call_operand.vmem [shape: f32[32,2], index: 3, kind: input, shape index: {}]
  %s4 = inlined_call_operand.vmem [shape: f32[32,1], index: 4, kind: input, shape index: {}]
  %s5 = inlined_call_operand.vmem [shape: f32[8,32], index: 5, kind: input, shape index: {}]
  %s6 = inlined_call_operand.<no memory space> [shape: f32[1], index: 6, kind: input, shape index: {}]
  %s7 = inlined_call_operand.hbm [shape: f32[2,32,256], index: 7, kind: output, shape index: {}]
  %s8 = sld [smem:[#allocation0]]
  $region65: #{tpu_custom_call.1} parent=0
    _
  %s10 = ssub.s32 1, %s8
  %s11 = scalar_select 0, %s10, %s8
  %12 = sst [smem:[#allocation2]] %s6
  $region1: #{tpu_custom_call.1} parent=0
    #allocation3 [shape = 'u8[65536]{0}', space=vmem, size = 0x10000, scoped, tag = 'input window, operand 0']
    #allocation4 [shape = 's32[2]{0}', space=sflag, size = 0x8, scoped, tag = 'scoped memory for tpu_custom_call.1']
    #allocation5 [shape = 's32[2]{0}', space=sflag, size = 0x8, scoped, tag = 'scoped memory for tpu_custom_call.1']
    #allocation6 [shape = 'u8[65536]{0}', space=vmem, size = 0x10000, scoped, tag = 'output window, operand 0']
    %13 = vsyncpa [#allocation4], 0
    %s14 = scalar_lea.sflag [#allocation4], 1
    %15 = vsyncpa %s14, 0
    %16 = vsyncpa [#allocation5], 0
    %s17 = scalar_lea.sflag [#allocation5], 1
    %18 = vsyncpa %s17, 0
    loop: start=0, step=1, limit=4
    $region2: #{tpu_custom_call.1} parent=1 // loop_pre_header
      _
    $region3: #{tpu_custom_call.1} parent=1 // loop_header
      %s20 = sphi 0, %s24
      %p21 = scmp.ge.s32.totalorder %s20, 4
      %s30 = sphi 0, %s32
      %s33 = sphi 0, %s30
      %s34 = sphi 0, %s33
      %s50 = sphi 0, %s34
      %s54 = sphi 0, %s54
      %s56 = sphi 0, %s54
      %s57 = sphi 0, %s56
      %s71 = sphi 0, %s57
      %s75 = sphi 0, %s75
      %s77 = sphi 0, %s75
      %s78 = sphi 0, %s77
      %s92 = sphi 0, %s78
      %s96 = sphi 0, %s96
      %s98 = sphi 0, %s96
      %s99 = sphi 0, %s98
      %s113 = sphi 0, %s99
      %s117 = sphi 0, %s117
      %s119 = sphi 0, %s117
      %s120 = sphi 0, %s119
      %s134 = sphi 0, %s120
      %s138 = sphi 0, %s138
      %s140 = sphi 0, %s138
      %s141 = sphi 0, %s140
      %s155 = sphi 0, %s141
      %s159 = sphi 0, %s159
      %s161 = sphi 0, %s159
      %s162 = sphi 0, %s161
      %s176 = sphi 0, %s162
      %s182 = sphi 0, %s184
      %s185 = sphi 0, %s182
      %s186 = sphi 0, %s185
      %s202 = sphi 0, %s186
    $region4: #{tpu_custom_call.1} parent=1 // loop_header_branch
      %23 = sbr.rel (%p21) target = $region8
    $region5: #{tpu_custom_call.1} parent=1 // loop_body
      %s25 = ssub.s32 %s20, 1
      %s26 = ssub.s32 %s20, 2
      %s27 = sadd.s32 %s20, 1
      %s28 = ssub.s32 %s20, %s27
      %p29 = scmp.eq.s32.totalorder %s28, 0
      %s31 = sadd.s32 %s30, 1
      %s32 = scalar_select %p29, %s30, %s31
      %p35 = pneg %p29
      %p36 = scmp.eq.s32.totalorder %s20, 1
      %p37 = por %p35, %p36
      %p38 = scmp.ne.s32.totalorder %s30, %s33
      %p39 = scmp.eq.s32.totalorder %s20, 0
      %p40 = por %p38, %p39
      %p41 = scmp.ne.s32.totalorder %s30, %s33
      %p42 = scmp.eq.s32.totalorder %s25, 1
      %p43 = por %p41, %p42
      %p44 = scmp.ne.s32.totalorder %s33, %s34
      %p45 = scmp.eq.s32.totalorder %s25, 0
      %p46 = por %p44, %p45
      %p47 = scmp.ne.s32.totalorder %s33, %s34
      %p48 = scmp.eq.s32.totalorder %s26, 1
      %p49 = por %p47, %p48
      %p51 = scmp.ne.s32.totalorder %s34, %s50
      %p52 = scmp.eq.s32.totalorder %s26, 0
      %p53 = por %p51, %p52
      %s55 = sadd.s32 %s54, 1
      %p58 = scmp.eq.s32.totalorder %s20, 1
      %p59 = scmp.ne.s32.totalorder %s54, %s56
      %p60 = scmp.eq.s32.totalorder %s20, 0
      %p61 = por %p59, %p60
      %p62 = scmp.ne.s32.totalorder %s54, %s56
      %p63 = scmp.eq.s32.totalorder %s25, 1
      %p64 = por %p62, %p63
      %p65 = scmp.ne.s32.totalorder %s56, %s57
      %p66 = scmp.eq.s32.totalorder %s25, 0
      %p67 = por %p65, %p66
      %p68 = scmp.ne.s32.totalorder %s56, %s57
      %p69 = scmp.eq.s32.totalorder %s26, 1
      %p70 = por %p68, %p69
      %p72 = scmp.ne.s32.totalorder %s57, %s71
      %p73 = scmp.eq.s32.totalorder %s26, 0
      %p74 = por %p72, %p73
      %s76 = sadd.s32 %s75, 1
      %p79 = scmp.eq.s32.totalorder %s20, 1
      %p80 = scmp.ne.s32.totalorder %s75, %s77
      %p81 = scmp.eq.s32.totalorder %s20, 0
      %p82 = por %p80, %p81
      %p83 = scmp.ne.s32.totalorder %s75, %s77
      %p84 = scmp.eq.s32.totalorder %s25, 1
      %p85 = por %p83, %p84
      %p86 = scmp.ne.s32.totalorder %s77, %s78
      %p87 = scmp.eq.s32.totalorder %s25, 0
      %p88 = por %p86, %p87
      %p89 = scmp.ne.s32.totalorder %s77, %s78
      %p90 = scmp.eq.s32.totalorder %s26, 1
      %p91 = por %p89, %p90
      %p93 = scmp.ne.s32.totalorder %s78, %s92
      %p94 = scmp.eq.s32.totalorder %s26, 0
      %p95 = por %p93, %p94
      %s97 = sadd.s32 %s96, 1
      %p100 = scmp.eq.s32.totalorder %s20, 1
      %p101 = scmp.ne.s32.totalorder %s96, %s98
      %p102 = scmp.eq.s32.totalorder %s20, 0
      %p103 = por %p101, %p102
      %p104 = scmp.ne.s32.totalorder %s96, %s98
      %p105 = scmp.eq.s32.totalorder %s25, 1
      %p106 = por %p104, %p105
      %p107 = scmp.ne.s32.totalorder %s98, %s99
      %p108 = scmp.eq.s32.totalorder %s25, 0
      %p109 = por %p107, %p108
      %p110 = scmp.ne.s32.totalorder %s98, %s99
      %p111 = scmp.eq.s32.totalorder %s26, 1
      %p112 = por %p110, %p111
      %p114 = scmp.ne.s32.totalorder %s99, %s113
      %p115 = scmp.eq.s32.totalorder %s26, 0
      %p116 = por %p114, %p115
      %s118 = sadd.s32 %s117, 1
      %p121 = scmp.eq.s32.totalorder %s20, 1
      %p122 = scmp.ne.s32.totalorder %s117, %s119
      %p123 = scmp.eq.s32.totalorder %s20, 0
      %p124 = por %p122, %p123
      %p125 = scmp.ne.s32.totalorder %s117, %s119
      %p126 = scmp.eq.s32.totalorder %s25, 1
      %p127 = por %p125, %p126
      %p128 = scmp.ne.s32.totalorder %s119, %s120
      %p129 = scmp.eq.s32.totalorder %s25, 0
      %p130 = por %p128, %p129
      %p131 = scmp.ne.s32.totalorder %s119, %s120
      %p132 = scmp.eq.s32.totalorder %s26, 1
      %p133 = por %p131, %p132
      %p135 = scmp.ne.s32.totalorder %s120, %s134
      %p136 = scmp.eq.s32.totalorder %s26, 0
      %p137 = por %p135, %p136
      %s139 = sadd.s32 %s138, 1
      %p142 = scmp.eq.s32.totalorder %s20, 1
      %p143 = scmp.ne.s32.totalorder %s138, %s140
      %p144 = scmp.eq.s32.totalorder %s20, 0
      %p145 = por %p143, %p144
      %p146 = scmp.ne.s32.totalorder %s138, %s140
      %p147 = scmp.eq.s32.totalorder %s25, 1
      %p148 = por %p146, %p147
      %p149 = scmp.ne.s32.totalorder %s140, %s141
      %p150 = scmp.eq.s32.totalorder %s25, 0
      %p151 = por %p149, %p150
      %p152 = scmp.ne.s32.totalorder %s140, %s141
      %p153 = scmp.eq.s32.totalorder %s26, 1
      %p154 = por %p152, %p153
      %p156 = scmp.ne.s32.totalorder %s141, %s155
      %p157 = scmp.eq.s32.totalorder %s26, 0
      %p158 = por %p156, %p157
      %s160 = sadd.s32 %s159, 1
      %p163 = scmp.eq.s32.totalorder %s20, 1
      %p164 = scmp.ne.s32.totalorder %s159, %s161
      %p165 = scmp.eq.s32.totalorder %s20, 0
      %p166 = por %p164, %p165
      %p167 = scmp.ne.s32.totalorder %s159, %s161
      %p168 = scmp.eq.s32.totalorder %s25, 1
      %p169 = por %p167, %p168
      %p170 = scmp.ne.s32.totalorder %s161, %s162
      %p171 = scmp.eq.s32.totalorder %s25, 0
      %p172 = por %p170, %p171
      %p173 = scmp.ne.s32.totalorder %s161, %s162
      %p174 = scmp.eq.s32.totalorder %s26, 1
      %p175 = por %p173, %p174
      %p177 = scmp.ne.s32.totalorder %s162, %s176
      %p178 = scmp.eq.s32.totalorder %s26, 0
      %p179 = por %p177, %p178
      %s180 = ssub.s32 %s20, %s27
      %p181 = scmp.eq.s32.totalorder %s180, 0
      %s183 = sadd.s32 %s182, 1
      %s184 = scalar_select %p181, %s182, %s183
      %p187 = pneg %p181
      %p188 = scmp.eq.s32.totalorder %s20, 1
      %p189 = por %p187, %p188
      %p190 = scmp.ne.s32.totalorder %s182, %s185
      %p191 = scmp.eq.s32.totalorder %s20, 0
      %p192 = por %p190, %p191
      %p193 = scmp.ne.s32.totalorder %s182, %s185
      %p194 = scmp.eq.s32.totalorder %s25, 1
      %p195 = por %p193, %p194
      %p196 = scmp.ne.s32.totalorder %s185, %s186
      %p197 = scmp.eq.s32.totalorder %s25, 0
      %p198 = por %p196, %p197
      %p199 = scmp.ne.s32.totalorder %s185, %s186
      %p200 = scmp.eq.s32.totalorder %s26, 1
      %p201 = por %p199, %p200
      %p203 = scmp.ne.s32.totalorder %s186, %s202
      %p204 = scmp.eq.s32.totalorder %s26, 0
      %p205 = por %p203, %p204
      %p206 = scmp.le.s32.totalorder 1, %s20
      %p207 = scmp.lt.s32.totalorder %s20, 3
      %p208 = pnand %p206, %p207
      %p209 = pneg %p208
      // Predicated region
      $region9: #{tpu_custom_call.1} parent=5 // pred_check
        _
      $region10: #{tpu_custom_call.1} parent=5 // pred_check_branch
        %211 = sbr.rel (%p208) target = $region12
      $region11: #{tpu_custom_call.1} parent=5 // pred_region
        %s212 = ssub.s32 %s20, 1
        // Predicated region
        $region13: #{tpu_custom_call.1} parent=11 // pred_check
          %p213 = pneg %p67
        $region14: #{tpu_custom_call.1} parent=11 // pred_check_branch
          %215 = sbr.rel (%p213) target = $region16
        $region15: #{tpu_custom_call.1} parent=11 // pred_region
          _
        $region16: #{tpu_custom_call.1} parent=11 // pred_fallthru
          _
        // Predicated region
        $region17: #{tpu_custom_call.1} parent=11 // pred_check
          %p216 = pneg %p88
        $region18: #{tpu_custom_call.1} parent=11 // pred_check_branch
          %218 = sbr.rel (%p216) target = $region20
        $region19: #{tpu_custom_call.1} parent=11 // pred_region
          _
        $region20: #{tpu_custom_call.1} parent=11 // pred_fallthru
          _
        // Predicated region
        $region21: #{tpu_custom_call.1} parent=11 // pred_check
          %p219 = pneg %p109
        $region22: #{tpu_custom_call.1} parent=11 // pred_check_branch
          %221 = sbr.rel (%p219) target = $region24
        $region23: #{tpu_custom_call.1} parent=11 // pred_region
          _
        $region24: #{tpu_custom_call.1} parent=11 // pred_fallthru
          _
        // Predicated region
        $region25: #{tpu_custom_call.1} parent=11 // pred_check
          %p222 = pneg %p130
        $region26: #{tpu_custom_call.1} parent=11 // pred_check_branch
          %224 = sbr.rel (%p222) target = $region28
        $region27: #{tpu_custom_call.1} parent=11 // pred_region
          _
        $region28: #{tpu_custom_call.1} parent=11 // pred_fallthru
          _
        // Predicated region
        $region29: #{tpu_custom_call.1} parent=11 // pred_check
          %p225 = pneg %p151
        $region30: #{tpu_custom_call.1} parent=11 // pred_check_branch
          %227 = sbr.rel (%p225) target = $region32
        $region31: #{tpu_custom_call.1} parent=11 // pred_region
          _
        $region32: #{tpu_custom_call.1} parent=11 // pred_fallthru
          _
        // Predicated region
        $region33: #{tpu_custom_call.1} parent=11 // pred_check
          %p228 = pneg %p172
        $region34: #{tpu_custom_call.1} parent=11 // pred_check_branch
          %230 = sbr.rel (%p228) target = $region36
        $region35: #{tpu_custom_call.1} parent=11 // pred_region
          _
        $region36: #{tpu_custom_call.1} parent=11 // pred_fallthru
          _
      $region12: #{tpu_custom_call.1} parent=5 // pred_fallthru
        _
      %p231 = scmp.lt.s32.totalorder %s20, 2
      // Predicated region
      $region37: #{tpu_custom_call.1} parent=5 // pred_check
        %p232 = pneg %p231
      $region38: #{tpu_custom_call.1} parent=5 // pred_check_branch
        %234 = sbr.rel (%p232) target = $region40
      $region39: #{tpu_custom_call.1} parent=5 // pred_region
        // Predicated region
        $region41: #{tpu_custom_call.1} parent=39 // pred_check
          %p235 = pneg %p40
        $region42: #{tpu_custom_call.1} parent=39 // pred_check_branch
          %237 = sbr.rel (%p235) target = $region44
        $region43: #{tpu_custom_call.1} parent=39 // pred_region
          %s238 = sand.u32 %s30, 1
          %s239 = scalar_lea.sflag [#allocation4], %s238
          %s240 = sand.u32 %s30, 1
          %s241 = smul.addr %s240, 64
          %s242 = scalar_lea.vmem [#allocation3], %s241
          %244 = vsyncadd %s239, 0
          %s245 = smul.addr %s20, 8
          %s246 = smul.addr %s245, 8
          %s247 = scalar_lea.hbm %s0, %s246
          %s248 = sshll.u32 %s247, 4
          %s249 = int_to_ptr.hbm [resolvable:$true] %s248
          %s250 = sshll.u32 %s242, 4
          %s251 = int_to_ptr.vmem [resolvable:$true] %s250
          %256 = dma.hbm_to_vmem [thread:$0]  %s249, 1024, %s251, %s239, 256, 256, 16
        $region44: #{tpu_custom_call.1} parent=39 // pred_fallthru
          _
      $region40: #{tpu_custom_call.1} parent=5 // pred_fallthru
        _
      %p257 = scmp.le.s32.totalorder 1, %s20
      %p258 = scmp.lt.s32.totalorder %s20, 3
      %p259 = pnand %p257, %p258
      %p260 = pneg %p259
      // Predicated region
      $region45: #{tpu_custom_call.1} parent=5 // pred_check
        _
      $region46: #{tpu_custom_call.1} parent=5 // pred_check_branch
        %262 = sbr.rel (%p259) target = $region48
      $region47: #{tpu_custom_call.1} parent=5 // pred_region
        %s263 = ssub.s32 %s20, 1
        %s264 = sand.u32 %s33, 1
        %s265 = scalar_lea.sflag [#allocation4], %s264
        %s266 = sand.u32 %s33, 1
        %s267 = smul.addr %s266, 64
        %s268 = scalar_lea.vmem [#allocation3], %s267
        // Predicated region
        $region49: #{tpu_custom_call.1} parent=47 // pred_check
          %p269 = pneg %p46
        $region50: #{tpu_custom_call.1} parent=47 // pred_check_branch
          %271 = sbr.rel (%p269) target = $region52
        $region51: #{tpu_custom_call.1} parent=47 // pred_region
          %273 = dma.done %s265, 1024
        $region52: #{tpu_custom_call.1} parent=47 // pred_fallthru
          _
        %s274 = sand.u32 %s33, 1
        %s275 = scalar_lea.sflag [#allocation4], %s274
        %s276 = sand.u32 %s33, 1
        %s277 = smul.addr %s276, 64
        %s278 = scalar_lea.vmem [#allocation3], %s277
        %p279 = pneg %p46
        %p280 = pneg %p43
        %p281 = pneg %p67
        %p282 = pneg %p64
        %p283 = pneg %p88
        %p284 = pneg %p85
        %p285 = pneg %p109
        %p286 = pneg %p106
        %p287 = pneg %p130
        %p288 = pneg %p127
        %p289 = pneg %p151
        %p290 = pneg %p148
        %p291 = pneg %p172
        %p292 = pneg %p169
        %p293 = pneg %p198
        %p294 = pneg %p195
        %s295 = sand.u32 %s185, 1
        %s296 = scalar_lea.sflag [#allocation5], %s295
        %s297 = sand.u32 %s185, 1
        %s298 = smul.addr %s297, 64
        %s299 = scalar_lea.vmem [#allocation6], %s298
        %v300 = vld [vmem:[%s268] sm:$0xff]
        %v301 = vld [vmem:[%s268 + $0x8] sm:$0xff]
        %v302 = vld [vmem:[%s268 + $0x10] sm:$0xff]
        %v303 = vld [vmem:[%s268 + $0x18] sm:$0xff]
        %v304 = vld [vmem:[%s268 + $0x20] sm:$0xff]
        %v305 = vld [vmem:[%s268 + $0x28] sm:$0xff]
        %v306 = vld [vmem:[%s268 + $0x30] sm:$0xff]
        %v307 = vld [vmem:[%s268 + $0x38] sm:$0xff]
        %v308 = vadd.f32 %v300, %v301
        %309 = vadd.xlane.f32.xlu0 %v308
        %v310 = vpop.xlane.xlu0 %309
        %v311 = vadd.f32 %v302, %v303
        %312 = vadd.xlane.f32.xlu0 %v311
        %v313 = vpop.xlane.xlu0 %312
        %v314 = vadd.f32 %v304, %v305
        %315 = vadd.xlane.f32.xlu0 %v314
        %v316 = vpop.xlane.xlu0 %315
        %v317 = vadd.f32 %v306, %v307
        %318 = vadd.xlane.f32.xlu0 %v317
        %v319 = vpop.xlane.xlu0 %318
        %v320 = vmul.f32 %v310, 0.00390625
        %v321 = vmul.f32 %v313, 0.00390625
        %v322 = vmul.f32 %v316, 0.00390625
        %v323 = vmul.f32 %v319, 0.00390625
        %v324 = vld [vmem:[%s1] sm:$0xff]
        %v325 = vld [vmem:[%s1 + $0x8] sm:$0xff]
        %v326 = vld [vmem:[%s1 + $0x10] sm:$0xff]
        %v327 = vld [vmem:[%s1 + $0x18] sm:$0xff]
        %v328 = vmul.f32 %v324, %v320
        %v329 = vmul.f32 %v325, %v321
        %v330 = vmul.f32 %v326, %v322
        %v331 = vmul.f32 %v327, %v323
        %vm332 = vcmask 15360
        %v333 = vsel %vm332, %v328, 0.0
        %v334 = vsel %vm332, %v329, 0.0
        %v335 = vadd.f32 %v333, %v334
        %v336 = vsel %vm332, %v330, 0.0
        %v337 = vadd.f32 %v335, %v336
        %v338 = vsel %vm332, %v331, 0.0
        %v339 = vadd.f32 %v337, %v338
        %v340 = vrot.slane %v339, 4
        %v341 = vadd.f32 %v339, %v340
        %v342 = vrot.slane %v341, 2
        %v343 = vadd.f32 %v341, %v342
        %v344 = vrot.slane %v343, 1
        %v345 = vadd.f32 %v343, %v344
        %v346 = vld [vmem:[%s2] sm:$0x1]
        %v347 = vadd.f32 %v345, %v346
        %v348 = vmax.f32 %v347, 0.0
        %v349 = vld [vmem:[%s3] sm:$0xff]
        %v350 = vld [vmem:[%s3 + $0x8] sm:$0xff]
        %v351 = vld [vmem:[%s3 + $0x10] sm:$0xff]
        %v352 = vld [vmem:[%s3 + $0x18] sm:$0xff]
        %v353 = vperm.slane %v348, 0
        %v354 = vmul.f32 %v349, %v353
        %v355 = vmul.f32 %v350, %v353
        %v356 = vmul.f32 %v351, %v353
        %v357 = vmul.f32 %v352, %v353
        %v358 = vsel %vm332, %v354, 0.0
        %359 = vadd.xlane.f32.xlu0 %v358
        %v360 = vpop.xlane.xlu0 %359
        %v361 = vsel %vm332, %v355, 0.0
        %362 = vadd.xlane.f32.xlu0 %v361
        %v363 = vpop.xlane.xlu0 %362
        %v364 = vsel %vm332, %v356, 0.0
        %365 = vadd.xlane.f32.xlu0 %v364
        %v366 = vpop.xlane.xlu0 %365
        %v367 = vsel %vm332, %v357, 0.0
        %368 = vadd.xlane.f32.xlu0 %v367
        %v369 = vpop.xlane.xlu0 %368
        %v370 = vld [vmem:[%s4] sm:$0xff]
        %v371 = vld [vmem:[%s4 + $0x8] sm:$0xff]
        %v372 = vld [vmem:[%s4 + $0x10] sm:$0xff]
        %v373 = vld [vmem:[%s4 + $0x18] sm:$0xff]
        %v374 = vadd.f32 %v360, %v370
        %v375 = vadd.f32 %v363, %v371
        %v376 = vadd.f32 %v366, %v372
        %v377 = vadd.f32 %v369, %v373
        %v378 = vsub.f32 0.0, %v374
        %v379 = vsub.f32 0.0, %v375
        %v380 = vsub.f32 0.0, %v376
        %v381 = vsub.f32 0.0, %v377
        %v382 = vmul.f32 %v378, 1.442695
        %v383 = vpow.pop %v382
        %v384 = vmul.f32 %v379, 1.442695
        %v385 = vpow.pop %v384
        %v386 = vmul.f32 %v380, 1.442695
        %v387 = vpow.pop %v386
        %v388 = vmul.f32 %v381, 1.442695
        %v389 = vpow.pop %v388
        %v390 = vadd.f32 %v383, 1.0
        %v391 = vadd.f32 %v385, 1.0
        %v392 = vadd.f32 %v387, 1.0
        %v393 = vadd.f32 %v389, 1.0
        %v394 = vrcp.pop %v390
        %v395 = vmul.f32 %v390, %v394
        %v396 = vsub.f32 1.0, %v395
        %v397 = vmul.f32 %v394, %v396
        %v398 = vadd.f32 %v394, %v397
        %vm399 = vweird.f32 %v390
        %vm400 = vweird.f32 %v394
        %vm401 = vmor %vm399, %vm400
        %v402 = vsel %vm401, %v394, %v398
        %v403 = vand.u32 2147483647, %v390
        %vm404 = vcmp.eq.f32.partialorder %v403, 8.507059e+37
        %v405 = vand.u32 %v390, 2147483648
        %v406 = vor.u32 1.1754944e-38, %v405
        %v407 = vsel %vm404, %v406, %v402
        %v408 = vmul.f32 1.0, %v407
        %v409 = vrcp.pop %v391
        %v410 = vmul.f32 %v391, %v409
        %v411 = vsub.f32 1.0, %v410
        %v412 = vmul.f32 %v409, %v411
        %v413 = vadd.f32 %v409, %v412
        %vm414 = vweird.f32 %v391
        %vm415 = vweird.f32 %v409
        %vm416 = vmor %vm414, %vm415
        %v417 = vsel %vm416, %v409, %v413
        %v418 = vand.u32 2147483647, %v391
        %vm419 = vcmp.eq.f32.partialorder %v418, 8.507059e+37
        %v420 = vand.u32 %v391, 2147483648
        %v421 = vor.u32 1.1754944e-38, %v420
        %v422 = vsel %vm419, %v421, %v417
        %v423 = vmul.f32 1.0, %v422
        %v424 = vrcp.pop %v392
        %v425 = vmul.f32 %v392, %v424
        %v426 = vsub.f32 1.0, %v425
        %v427 = vmul.f32 %v424, %v426
        %v428 = vadd.f32 %v424, %v427
        %vm429 = vweird.f32 %v392
        %vm430 = vweird.f32 %v424
        %vm431 = vmor %vm429, %vm430
        %v432 = vsel %vm431, %v424, %v428
        %v433 = vand.u32 2147483647, %v392
        %vm434 = vcmp.eq.f32.partialorder %v433, 8.507059e+37
        %v435 = vand.u32 %v392, 2147483648
        %v436 = vor.u32 1.1754944e-38, %v435
        %v437 = vsel %vm434, %v436, %v432
        %v438 = vmul.f32 1.0, %v437
        %v439 = vrcp.pop %v393
        %v440 = vmul.f32 %v393, %v439
        %v441 = vsub.f32 1.0, %v440
        %v442 = vmul.f32 %v439, %v441
        %v443 = vadd.f32 %v439, %v442
        %vm444 = vweird.f32 %v393
        %vm445 = vweird.f32 %v439
        %vm446 = vmor %vm444, %vm445
        %v447 = vsel %vm446, %v439, %v443
        %v448 = vand.u32 2147483647, %v393
        %vm449 = vcmp.eq.f32.partialorder %v448, 8.507059e+37
        %v450 = vand.u32 %v393, 2147483648
        %v451 = vor.u32 1.1754944e-38, %v450
        %v452 = vsel %vm449, %v451, %v447
        %v453 = vmul.f32 1.0, %v452
        %v454 = vld [vmem:[%s5] sm:$0xff]
        %vm455 = vcmask 261120
        %v457 = vsel %vm455, %v454, 0
        %459 = vmatpush.msra.mxu0 0.0
        %460 = vmatpush.msra.mxu0 0.0
        %461 = vmatpush.msra.mxu0 0.0
        %462 = vmatpush.msra.mxu0 0.0
        %463 = vmatpush.msra.mxu0 0.0
        %464 = vmatpush.msra.mxu0 0.0
        %465 = vmatpush.msra.mxu0 0.0
        %466 = vmatpush.msra.mxu0 0.0
        %467 = vmatpush.msra.mxu0 0.0
        %468 = vmatpush.msra.mxu0 0.0
        %469 = vmatpush.msra.mxu0 0.0
        %470 = vmatpush.msra.mxu0 0.0
        %471 = vmatpush.msra.mxu0 %v306
        %472 = vmatpush.msra.mxu0 %v304
        %473 = vmatpush.msra.mxu0 %v302
        %474 = vmatpush.msra.mxu0 %v300
        %475 = vmatmul.f32.gmra.mxu0 %v457
        %v476 = vpop.f32.mrf.mxu0
        %v477 = vadd.f32 0.0, %v476
        %478 = vdwg.mxu0
        %479 = vmatpush.msra.mxu0 0.0
        %480 = vmatpush.msra.mxu0 0.0
        %481 = vmatpush.msra.mxu0 0.0
        %482 = vmatpush.msra.mxu0 0.0
        %483 = vmatpush.msra.mxu0 0.0
        %484 = vmatpush.msra.mxu0 0.0
        %485 = vmatpush.msra.mxu0 0.0
        %486 = vmatpush.msra.mxu0 0.0
        %487 = vmatpush.msra.mxu0 0.0
        %488 = vmatpush.msra.mxu0 0.0
        %489 = vmatpush.msra.mxu0 0.0
        %490 = vmatpush.msra.mxu0 0.0
        %491 = vmatpush.msra.mxu0 %v307
        %492 = vmatpush.msra.mxu0 %v305
        %493 = vmatpush.msra.mxu0 %v303
        %494 = vmatpush.msra.mxu0 %v301
        %495 = vmatmul.f32.gmra.mxu0 %v457
        %v496 = vpop.f32.mrf.mxu0
        %v497 = vadd.f32 0.0, %v496
        %498 = vdwg.mxu0
        %s499 = sld [smem:[#allocation2]]
        %v500 = vstv %s499
        %v501 = vadd.f32 %v477, %v500
        %v502 = vadd.f32 %v497, %v500
        %v503 = vsub.f32 0.0, %v501
        %v504 = vsub.f32 0.0, %v502
        %v505 = vmul.f32 %v503, 1.442695
        %v506 = vpow.pop %v505
        %v507 = vmul.f32 %v504, 1.442695
        %v508 = vpow.pop %v507
        %v509 = vadd.f32 %v506, 1.0
        %v510 = vadd.f32 %v508, 1.0
        %v511 = vrcp.pop %v509
        %v512 = vmul.f32 %v509, %v511
        %v513 = vsub.f32 1.0, %v512
        %v514 = vmul.f32 %v511, %v513
        %v515 = vadd.f32 %v511, %v514
        %vm516 = vweird.f32 %v509
        %vm517 = vweird.f32 %v511
        %vm518 = vmor %vm516, %vm517
        %v519 = vsel %vm518, %v511, %v515
        %v520 = vand.u32 2147483647, %v509
        %vm521 = vcmp.eq.f32.partialorder %v520, 8.507059e+37
        %v522 = vand.u32 %v509, 2147483648
        %v523 = vor.u32 1.1754944e-38, %v522
        %v524 = vsel %vm521, %v523, %v519
        %v525 = vmul.f32 1.0, %v524
        %v526 = vrcp.pop %v510
        %v527 = vmul.f32 %v510, %v526
        %v528 = vsub.f32 1.0, %v527
        %v529 = vmul.f32 %v526, %v528
        %v530 = vadd.f32 %v526, %v529
        %vm531 = vweird.f32 %v510
        %vm532 = vweird.f32 %v526
        %vm533 = vmor %vm531, %vm532
        %v534 = vsel %vm533, %v526, %v530
        %v535 = vand.u32 2147483647, %v510
        %vm536 = vcmp.eq.f32.partialorder %v535, 8.507059e+37
        %v537 = vand.u32 %v510, 2147483648
        %v538 = vor.u32 1.1754944e-38, %v537
        %v539 = vsel %vm536, %v538, %v534
        %v540 = vmul.f32 1.0, %v539
        %542 = vset.pattern.permute.xlu0 0
        %543 = vperm.xlu0 %542, %v408
        %v544 = vpop.permute.xlu0 %543
        %547 = vset.pattern.permute.xlu0 0
        %548 = vperm.xlu0 %547, %v423
        %v549 = vpop.permute.xlu0 %548
        %552 = vset.pattern.permute.xlu0 0
        %553 = vperm.xlu0 %552, %v438
        %v554 = vpop.permute.xlu0 %553
        %557 = vset.pattern.permute.xlu0 0
        %558 = vperm.xlu0 %557, %v453
        %v559 = vpop.permute.xlu0 %558
        %v561 = vperm.slane %v525, 0
        %v562 = vperm.slane %v540, 0
        %v563 = vadd.f32 %v544, %v561
        %v564 = vadd.f32 %v544, %v562
        %v565 = vadd.f32 %v549, %v561
        %v566 = vadd.f32 %v549, %v562
        %v567 = vadd.f32 %v554, %v561
        %v568 = vadd.f32 %v554, %v562
        %v569 = vadd.f32 %v559, %v561
        %v570 = vadd.f32 %v559, %v562
        %v571 = vmul.f32 %v300, %v563
        %v572 = vmul.f32 %v301, %v564
        %v573 = vmul.f32 %v302, %v565
        %v574 = vmul.f32 %v303, %v566
        %v575 = vmul.f32 %v304, %v567
        %v576 = vmul.f32 %v305, %v568
        %v577 = vmul.f32 %v306, %v569
        %v578 = vmul.f32 %v307, %v570
        %579 = vst [vmem:[%s299] sm:$0xff] %v571
        %580 = vst [vmem:[%s299 + $0x8] sm:$0xff] %v572
        %581 = vst [vmem:[%s299 + $0x10] sm:$0xff] %v573
        %582 = vst [vmem:[%s299 + $0x18] sm:$0xff] %v574
        %583 = vst [vmem:[%s299 + $0x20] sm:$0xff] %v575
        %584 = vst [vmem:[%s299 + $0x28] sm:$0xff] %v576
        %585 = vst [vmem:[%s299 + $0x30] sm:$0xff] %v577
        %586 = vst [vmem:[%s299 + $0x38] sm:$0xff] %v578
        %s587 = sand.u32 %s185, 1
        %s588 = scalar_lea.sflag [#allocation5], %s587
        %s589 = sand.u32 %s185, 1
        %s590 = smul.addr %s589, 64
        %s591 = scalar_lea.vmem [#allocation6], %s590
        // Predicated region
        $region53: #{tpu_custom_call.1} parent=47 // pred_check
          %p592 = pneg %p195
        $region54: #{tpu_custom_call.1} parent=47 // pred_check_branch
          %594 = sbr.rel (%p592) target = $region56
        $region55: #{tpu_custom_call.1} parent=47 // pred_region
          %596 = vsyncadd %s588, 0
          %s597 = smul.addr %s25, 8
          %s598 = smul.addr %s597, 8
          %s599 = scalar_lea.hbm %s7, %s598
          %s600 = sshll.u32 %s591, 4
          %s601 = int_to_ptr.vmem [resolvable:$true] %s600
          %s602 = sshll.u32 %s599, 4
          %s603 = int_to_ptr.hbm [resolvable:$true] %s602
          %608 = dma.vmem_to_hbm [thread:$0]  %s601, 1024, %s603, %s588, 256, 256, 16
        $region56: #{tpu_custom_call.1} parent=47 // pred_fallthru
          _
      $region48: #{tpu_custom_call.1} parent=5 // pred_fallthru
        _
      %p609 = scmp.le.s32.totalorder 2, %s20
      // Predicated region
      $region57: #{tpu_custom_call.1} parent=5 // pred_check
        %p610 = pneg %p609
      $region58: #{tpu_custom_call.1} parent=5 // pred_check_branch
        %612 = sbr.rel (%p610) target = $region60
      $region59: #{tpu_custom_call.1} parent=5 // pred_region
        %s613 = ssub.s32 %s20, 2
        // Predicated region
        $region61: #{tpu_custom_call.1} parent=59 // pred_check
          %p614 = pneg %p201
        $region62: #{tpu_custom_call.1} parent=59 // pred_check_branch
          %616 = sbr.rel (%p614) target = $region64
        $region63: #{tpu_custom_call.1} parent=59 // pred_region
          %s617 = sand.u32 %s186, 1
          %s618 = scalar_lea.sflag [#allocation5], %s617
          %s619 = sand.u32 %s186, 1
          %s620 = smul.addr %s619, 64
          %s621 = scalar_lea.vmem [#allocation6], %s620
          %623 = dma.done %s618, 1024
        $region64: #{tpu_custom_call.1} parent=59 // pred_fallthru
          _
      $region60: #{tpu_custom_call.1} parent=5 // pred_fallthru
        _
    $region6: #{tpu_custom_call.1} parent=1 // loop_footer
      %s24 = sadd.s32 1, %s20
    $region7: #{tpu_custom_call.1} parent=1 // loop_footer_branch
      %19 = sbr.rel target = $region3
    $region8: #{tpu_custom_call.1} parent=1 // loop_exit
      _
    %624 = vsyncpa [#allocation4], 1
    %s625 = scalar_lea.sflag [#allocation4], 1
    %626 = vsyncpa %s625, 1
    %627 = vsyncpa [#allocation5], 1
    %s628 = scalar_lea.sflag [#allocation5], 1
    %629 = vsyncpa %s628, 1

</llo_original>
